<compile_context>
chip_gen: v7x
topology: tpu7x:2x2x1
jax: 0.10.0
libtpu: 0.0.40
codegen_flags: <defaults>
</compile_context>

<pallas_src>
import jax
import jax.numpy as jnp
from jax.experimental import pallas as pl
from jax.experimental.pallas import tpu as pltpu


def ffn_kernel(x_ref, w1_ref, b1_ref, w2_ref, b2_ref, o_ref, acc_ref):
    # x_ref:  (tm, D)  bf16      w1_ref: (D, th) bf16   b1_ref: (1, th) f32
    # w2_ref: (th, D)  bf16      b2_ref: (1, D)  f32
    # o_ref:  (tm, D)  out dtype acc_ref:(tm, D) f32 (resident across k axis)
    k = pl.program_id(1)

    @pl.when(k == 0)
    def _():
        acc_ref[...] = jnp.zeros_like(acc_ref)

    # fc1 chunk + bias + relu (f32 accumulation on the MXU, f32 elementwise).
    h = jnp.dot(x_ref[...], w1_ref[...], preferred_element_type=jnp.float32)
    h = jnp.maximum(h + b1_ref[...], 0.0)

    # fc2 partial product over this H-chunk, accumulate into f32 scratch.
    acc_ref[...] += jnp.dot(h.astype(w2_ref.dtype), w2_ref[...],
                            preferred_element_type=jnp.float32)

    @pl.when(k == pl.num_programs(1) - 1)
    def _():
        o_ref[...] = (acc_ref[...] + b2_ref[...]).astype(o_ref.dtype)


def _pick_hidden_tile(H, requested):
    """Largest multiple of 128 that divides H and is <= requested."""
    if H % requested == 0:
        return requested
    cand = (min(requested, H) // 128) * 128
    while cand >= 128:
        if H % cand == 0:
            return cand
        cand -= 128
    return H  # H itself is not 128-aligned; use the whole thing.


def feed_forward(x, w1_t, b1, w2_t, b2, *, tm=256, th=512,
                 compute_dtype=jnp.bfloat16):
    """x: [M, D]; w1_t: [D, H]; b1: [H]; w2_t: [H, D]; b2: [D]."""
    M, D = x.shape
    H = w1_t.shape[1]
    out_dtype = x.dtype

    th = _pick_hidden_tile(H, th)

    # Adaptive token tile: never bigger than M rounded up to a sublane
    # multiple (avoids padding a 16-token batch up to 256 rows of MXU work).
    tm = max(8, min(tm, ((M + 7) // 8) * 8))

    # Pad the token dimension up to a multiple of tm (padded rows discarded).
    m_tiles = pl.cdiv(M, tm)
    Mp = m_tiles * tm
    if Mp != M:
        x = jnp.pad(x, ((0, Mp - M), (0, 0)))

    # bf16 matmul operands, f32 biases (bias add / relu run in f32).
    xc = x.astype(compute_dtype)
    w1c = w1_t.astype(compute_dtype)
    w2c = w2_t.astype(compute_dtype)
    b1_2d = b1.reshape(1, H).astype(jnp.float32)
    b2_2d = b2.reshape(1, D).astype(jnp.float32)

    in_bytes = jnp.dtype(compute_dtype).itemsize
    out_bytes = jnp.dtype(out_dtype).itemsize

    # Advisory cost estimate so XLA can schedule neighbours around this call.
    cost = pl.CostEstimate(
        flops=4 * Mp * D * H,
        transcendentals=0,
        bytes_accessed=(Mp * D * in_bytes            # x
                        + 2 * D * H * in_bytes       # W1 + W2
                        + (H + D) * 4                # biases
                        + Mp * D * out_bytes),       # output
    )

    # Explicit VMEM budget: double-buffered input tiles + output tile + acc.
    per_step = (tm * D * in_bytes          # x tile
                + D * th * in_bytes        # W1 chunk
                + th * D * in_bytes        # W2 chunk
                + (th + D) * 4             # bias tiles
                + tm * D * out_bytes)      # output tile
    vmem_est = 2 * per_step + tm * D * 4   # + f32 accumulator scratch
    vmem_limit = int(min(max(2 * vmem_est, 32 * 1024 * 1024),
                         64 * 1024 * 1024))

    out = pl.pallas_call(
        ffn_kernel,
        out_shape=jax.ShapeDtypeStruct((Mp, D), out_dtype),
        grid_spec=pltpu.PrefetchScalarGridSpec(
            num_scalar_prefetch=0,
            grid=(m_tiles, H // th),
            in_specs=[
                pl.BlockSpec((tm, D), lambda i, k: (i, 0)),   # x tile
                pl.BlockSpec((D, th), lambda i, k: (0, k)),   # W1^T chunk
                pl.BlockSpec((1, th), lambda i, k: (0, k)),   # b1 chunk
                pl.BlockSpec((th, D), lambda i, k: (k, 0)),   # W2^T chunk
                pl.BlockSpec((1, D), lambda i, k: (0, 0)),    # b2
            ],
            out_specs=pl.BlockSpec((tm, D), lambda i, k: (i, 0)),
            scratch_shapes=[pltpu.VMEM((tm, D), jnp.float32)],
        ),
        compiler_params=pltpu.CompilerParams(
            dimension_semantics=("parallel", "arbitrary"),
            vmem_limit_bytes=vmem_limit),
        cost_estimate=cost,
    )(xc, w1c, b1_2d, w2c, b2_2d)

    return out[:M]


def feed_forward_ref(x, w1_t, b1, w2_t, b2, compute_dtype=jnp.float32):
    xc = x.astype(compute_dtype)
    w1c = w1_t.astype(compute_dtype)
    w2c = w2_t.astype(compute_dtype)
    h = jnp.dot(xc, w1c, preferred_element_type=jnp.float32) + b1
    h = jnp.maximum(h, 0.0)
    y = jnp.dot(h.astype(compute_dtype), w2c,
                preferred_element_type=jnp.float32) + b2
    return y.astype(x.dtype)


if __name__ == "__main__":
    # Small shapes consistent with the module (embed_size scaled down).
    embed_size = 256
    expansion_factor = 4
    hidden = expansion_factor * embed_size     # 1024
    batch, seq = 2, 8
    M = batch * seq                            # 16 tokens

    key = jax.random.PRNGKey(0)
    kx, kw1, kb1, kw2, kb2 = jax.random.split(key, 5)

    x = jax.random.normal(kx, (M, embed_size), dtype=jnp.float32)
    # PyTorch Linear weight is [out, in]; we store the transpose [in, out].
    w1_t = jax.random.normal(kw1, (embed_size, hidden), dtype=jnp.float32) * 0.02
    b1 = jax.random.normal(kb1, (hidden,), dtype=jnp.float32) * 0.02
    w2_t = jax.random.normal(kw2, (hidden, embed_size), dtype=jnp.float32) * 0.02
    b2 = jax.random.normal(kb2, (embed_size,), dtype=jnp.float32) * 0.02

    out = feed_forward(x, w1_t, b1, w2_t, b2)
    out = jax.block_until_ready(out)
    assert out.shape == (M, embed_size)

    # Tight check against a reference that uses the same bf16 matmul inputs.
    ref_bf16 = feed_forward_ref(x, w1_t, b1, w2_t, b2,
                                compute_dtype=jnp.bfloat16)
    assert jnp.allclose(out, ref_bf16, atol=5e-3, rtol=5e-3), (
        jnp.max(jnp.abs(out - ref_bf16)))

    # Looser sanity check against the full-f32 reference.
    ref_f32 = feed_forward_ref(x, w1_t, b1, w2_t, b2,
                               compute_dtype=jnp.float32)
    assert jnp.allclose(out, ref_f32, atol=3e-2, rtol=3e-2), (
        jnp.max(jnp.abs(out - ref_f32)))

    print("KERNEL_OK")
</pallas_src>

<mosaic_0001>
module attributes {stable_mosaic.version = 11 : i64} {
  func.func @ffn_kernel(%arg0: i32, %arg1: i32, %arg2: memref<16x256xbf16, #tpu.memory_space<vmem>>, %arg3: memref<256x512xbf16, #tpu.memory_space<vmem>>, %arg4: memref<1x512xf32, #tpu.memory_space<vmem>>, %arg5: memref<512x256xbf16, #tpu.memory_space<vmem>>, %arg6: memref<1x256xf32, #tpu.memory_space<vmem>>, %arg7: memref<16x256xf32, #tpu.memory_space<vmem>>, %arg8: memref<16x256xf32, #tpu.memory_space<vmem>>) attributes {dimension_semantics = [#tpu.dimension_semantics<parallel>, #tpu.dimension_semantics<arbitrary>], iteration_bounds = array<i64: 1, 2>, scalar_prefetch = 0 : i64, scratch_operands = 1 : i64, tpu.core_type = #tpu.core_type<tc>, window_params = [{transform_indices = @transform_0, window_bounds = array<i64: 16, 256>}, {transform_indices = @transform_1, window_bounds = array<i64: 256, 512>}, {transform_indices = @transform_2, window_bounds = array<i64: 1, 512>}, {transform_indices = @transform_3, window_bounds = array<i64: 512, 256>}, {pipeline_mode = #tpu.pipeline_mode<synchronous>, transform_indices = @transform_4, window_bounds = array<i64: 1, 256>}, {transform_indices = @transform_5, window_bounds = array<i64: 16, 256>}]} {
    %c0_i32 = arith.constant 0 : i32
    %0 = arith.cmpi eq, %arg1, %c0_i32 : i32
    %1 = arith.extui %0 : i1 to i32
    %c0_i32_0 = arith.constant 0 : i32
    %2 = arith.cmpi ne, %1, %c0_i32_0 : i32
    scf.if %2 {
      %cst_15 = arith.constant 0.000000e+00 : f32
      %20 = vector.broadcast %cst_15 : f32 to vector<16x256xf32>
      %c0_16 = arith.constant 0 : index
      %c0_17 = arith.constant 0 : index
      %21 = vector.load %arg8[%c0_16, %c0_17] : memref<16x256xf32, #tpu.memory_space<vmem>>, vector<16x256xf32>
      tpu.vector_store %arg8[%c0_16, %c0_17], %20 {strides = array<i32>} : memref<16x256xf32, #tpu.memory_space<vmem>>, vector<16x256xf32>,
    } else {
    }
    %c0 = arith.constant 0 : index
    %c0_1 = arith.constant 0 : index
    %3 = vector.load %arg2[%c0, %c0_1] : memref<16x256xbf16, #tpu.memory_space<vmem>>, vector<16x256xbf16>
    %c0_2 = arith.constant 0 : index
    %c0_3 = arith.constant 0 : index
    %4 = vector.load %arg3[%c0_2, %c0_3] : memref<256x512xbf16, #tpu.memory_space<vmem>>, vector<256x512xbf16>
    %cst = arith.constant dense<0.000000e+00> : vector<16x512xf32>
    %5 = tpu.matmul %3, %4, %cst {dimension_numbers = #tpu.dot_dimension_numbers<[1], [0], [0], [1], [0, 0, 1, 1], [], []>} : vector<16x256xbf16>, vector<256x512xbf16>, vector<16x512xf32> -> vector<16x512xf32>
    %c0_4 = arith.constant 0 : index
    %c0_5 = arith.constant 0 : index
    %6 = vector.load %arg4[%c0_4, %c0_5] : memref<1x512xf32, #tpu.memory_space<vmem>>, vector<1x512xf32>
    %7 = vector.broadcast %6 : vector<1x512xf32> to vector<16x512xf32>
    %8 = arith.addf %5, %7 : vector<16x512xf32>
    %cst_6 = arith.constant 0.000000e+00 : f32
    %9 = vector.broadcast %cst_6 : f32 to vector<16x512xf32>
    %10 = arith.maximumf %8, %9 : vector<16x512xf32>
    %c0_7 = arith.constant 0 : index
    %c0_8 = arith.constant 0 : index
    %11 = vector.load %arg8[%c0_7, %c0_8] : memref<16x256xf32, #tpu.memory_space<vmem>>, vector<16x256xf32>
    %12 = arith.truncf %10 : vector<16x512xf32> to vector<16x512xbf16>
    %c0_9 = arith.constant 0 : index
    %c0_10 = arith.constant 0 : index
    %13 = vector.load %arg5[%c0_9, %c0_10] : memref<512x256xbf16, #tpu.memory_space<vmem>>, vector<512x256xbf16>
    %cst_11 = arith.constant dense<0.000000e+00> : vector<16x256xf32>
    %14 = tpu.matmul %12, %13, %cst_11 {dimension_numbers = #tpu.dot_dimension_numbers<[1], [0], [0], [1], [0, 0, 1, 1], [], []>} : vector<16x512xbf16>, vector<512x256xbf16>, vector<16x256xf32> -> vector<16x256xf32>
    %15 = arith.addf %11, %14 : vector<16x256xf32>
    %c0_12 = arith.constant 0 : index
    %c0_13 = arith.constant 0 : index
    %16 = vector.load %arg8[%c0_12, %c0_13] : memref<16x256xf32, #tpu.memory_space<vmem>>, vector<16x256xf32>
    tpu.vector_store %arg8[%c0_12, %c0_13], %15 {strides = array<i32>} : memref<16x256xf32, #tpu.memory_space<vmem>>, vector<16x256xf32>,
    %c1_i32 = arith.constant 1 : i32
    %17 = arith.cmpi eq, %arg1, %c1_i32 : i32
    %18 = arith.extui %17 : i1 to i32
    %c0_i32_14 = arith.constant 0 : i32
    %19 = arith.cmpi ne, %18, %c0_i32_14 : i32
    scf.if %19 {
      %c0_15 = arith.constant 0 : index
      %c0_16 = arith.constant 0 : index
      %20 = vector.load %arg8[%c0_15, %c0_16] : memref<16x256xf32, #tpu.memory_space<vmem>>, vector<16x256xf32>
      %c0_17 = arith.constant 0 : index
      %c0_18 = arith.constant 0 : index
      %21 = vector.load %arg6[%c0_17, %c0_18] : memref<1x256xf32, #tpu.memory_space<vmem>>, vector<1x256xf32>
      %22 = vector.broadcast %21 : vector<1x256xf32> to vector<16x256xf32>
      %23 = arith.addf %20, %22 : vector<16x256xf32>
      %c0_19 = arith.constant 0 : index
      %c0_20 = arith.constant 0 : index
      %24 = vector.load %arg7[%c0_19, %c0_20] : memref<16x256xf32, #tpu.memory_space<vmem>>, vector<16x256xf32>
      tpu.vector_store %arg7[%c0_19, %c0_20], %23 {strides = array<i32>} : memref<16x256xf32, #tpu.memory_space<vmem>>, vector<16x256xf32>,
    } else {
    }
    return
  }
  func.func @transform_0(%arg0: i32, %arg1: i32) -> (i32, i32) {
    %c0_i32 = arith.constant 0 : i32
    %c0_i32_0 = arith.constant 0 : i32
    return %arg0, %c0_i32 : i32, i32
  }
  func.func @transform_1(%arg0: i32, %arg1: i32) -> (i32, i32) {
    %c0_i32 = arith.constant 0 : i32
    %c0_i32_0 = arith.constant 0 : i32
    return %c0_i32, %arg1 : i32, i32
  }
  func.func @transform_2(%arg0: i32, %arg1: i32) -> (i32, i32) {
    %c0_i32 = arith.constant 0 : i32
    %c0_i32_0 = arith.constant 0 : i32
    return %c0_i32, %arg1 : i32, i32
  }
  func.func @transform_3(%arg0: i32, %arg1: i32) -> (i32, i32) {
    %c0_i32 = arith.constant 0 : i32
    %c0_i32_0 = arith.constant 0 : i32
    return %arg1, %c0_i32 : i32, i32
  }
  func.func @transform_4(%arg0: i32, %arg1: i32) -> (i32, i32) {
    %c0_i32 = arith.constant 0 : i32
    %c0_i32_0 = arith.constant 0 : i32
    %c0_i32_1 = arith.constant 0 : i32
    return %c0_i32, %c0_i32_0 : i32, i32
  }
  func.func @transform_5(%arg0: i32, %arg1: i32) -> (i32, i32) {
    %c0_i32 = arith.constant 0 : i32
    %c0_i32_0 = arith.constant 0 : i32
    return %arg0, %c0_i32 : i32, i32
  }
}

</mosaic_0001>

<llo_original>
// kernel: tpu_custom_call.1
$region0: #{tpu_custom_call.1}
  #allocation0 [shape = 'u32[]', space=smem, size = 0x4, offset = 0x4, fixed_abs, tag = 'smem constant byte address 0x4 - core index']
  #allocation1 [shape = 'u32[144,128]{1,0:T(1,128)}', space=vmem, size = 0x12000, scoped, tag = 'internal scratch']
  #allocation2 [shape = 'f32[16,256]{1,0:T(8,128)}', space=vmem, size = 0x4000, scoped, tag = 'scratch operand']
  %s0 = inlined_call_operand.hbm [shape: bf16[16,256], index: 0, kind: input, shape index: {}]
  %s1 = inlined_call_operand.hbm [shape: bf16[256,1024], index: 1, kind: input, shape index: {}]
  %s2 = inlined_call_operand.hbm [shape: f32[1,1024], index: 2, kind: input, shape index: {}]
  %s3 = inlined_call_operand.hbm [shape: bf16[1024,256], index: 3, kind: input, shape index: {}]
  %s4 = inlined_call_operand.vmem [shape: f32[1,256], index: 4, kind: input, shape index: {}]
  %s5 = inlined_call_operand.hbm [shape: f32[16,256], index: 5, kind: output, shape index: {}]
  %s6 = sld [smem:[#allocation0]]
  $region77: #{tpu_custom_call.1} parent=0
    _
  %s8 = ssub.s32 1, %s6
  %s9 = scalar_select 0, %s8, %s6
  $region1: #{tpu_custom_call.1} parent=0
    #allocation3 [shape = 'u8[8192]{0}', space=vmem, size = 0x2000, scoped, tag = 'input window, operand 0, single buffered']
    #allocation4 [shape = 's32[2]{0}', space=sflag, size = 0x8, scoped, tag = 'scoped memory for tpu_custom_call.1']
    #allocation5 [shape = 's32[2]{0}', space=sflag, size = 0x8, scoped, tag = 'scoped memory for tpu_custom_call.1']
    #allocation6 [shape = 'u8[524288]{0}', space=vmem, size = 0x80000, scoped, tag = 'input window, operand 1']
    #allocation7 [shape = 's32[2]{0}', space=sflag, size = 0x8, scoped, tag = 'scoped memory for tpu_custom_call.1']
    #allocation8 [shape = 'u8[4096]{0}', space=vmem, size = 0x1000, scoped, tag = 'input window, operand 2']
    #allocation9 [shape = 'u8[524288]{0}', space=vmem, size = 0x80000, scoped, tag = 'input window, operand 3']
    #allocation10 [shape = 's32[2]{0}', space=sflag, size = 0x8, scoped, tag = 'scoped memory for tpu_custom_call.1']
    #allocation11 [shape = 'u8[16384]{0}', space=vmem, size = 0x4000, scoped, tag = 'output window, operand 0, single buffered']
    %10 = vsyncpa [#allocation4], 0
    %11 = vsyncpa [#allocation7], 0
    %s12 = scalar_lea.sflag [#allocation7], 1
    %13 = vsyncpa %s12, 0
    %14 = vsyncpa [#allocation10], 0
    %s15 = scalar_lea.sflag [#allocation10], 1
    %16 = vsyncpa %s15, 0
    %17 = vsyncpa [#allocation5], 0
    loop: start=0, step=1, limit=4
    $region2: #{tpu_custom_call.1} parent=1 // loop_pre_header
      _
    $region3: #{tpu_custom_call.1} parent=1 // loop_header
      %s19 = sphi 0, %s23
      %p20 = scmp.ge.s32.totalorder %s19, 4
      %s26 = sphi 0, %s38
      %s27 = sphi 0, %s34
      %s28 = sphi 0, %s26
      %s29 = sphi 0, %s27
      %s30 = sphi 0, %s28
      %s31 = sphi 0, %s29
      %s41 = sphi 0, %s43
      %s44 = sphi 0, %s41
      %s45 = sphi 0, %s44
      %s61 = sphi 0, %s45
      %s67 = sphi 0, %s69
      %s70 = sphi 0, %s67
      %s71 = sphi 0, %s70
      %s87 = sphi 0, %s71
      %s93 = sphi 0, %s95
      %s96 = sphi 0, %s93
      %s97 = sphi 0, %s96
      %s113 = sphi 0, %s97
      %s119 = sphi 0, %s121
      %s122 = sphi 0, %s119
      %s123 = sphi 0, %s122
      %s139 = sphi 0, %s123
      %s143 = sphi 0, %s143
      %s145 = sphi 0, %s143
      %s146 = sphi 0, %s145
      %s160 = sphi 0, %s146
      %s166 = sphi 0, %s168
      %s169 = sphi 0, %s166
      %s170 = sphi 0, %s169
      %s186 = sphi 0, %s170
    $region4: #{tpu_custom_call.1} parent=1 // loop_header_branch
      %22 = sbr.rel (%p20) target = $region8
    $region5: #{tpu_custom_call.1} parent=1 // loop_body
      %s24 = ssub.s32 %s19, 1
      %s25 = ssub.s32 %s19, 2
      %s32 = sadd.s32 1, %s27
      %p33 = scmp.ge.s32.totalorder %s32, 2
      %s34 = scalar_select %p33, 0, %s32
      %s35 = sadd.s32 1, %s26
      %s36 = scalar_select %p33, %s35, %s26
      %p37 = scmp.ge.s32.totalorder %s36, 1
      %s38 = scalar_select %p37, 0, %s36
      %s39 = ssub.s32 %s26, %s38
      %p40 = scmp.eq.s32.totalorder %s39, 0
      %s42 = sadd.s32 %s41, 1
      %s43 = scalar_select %p40, %s41, %s42
      %p46 = pneg %p40
      %p47 = scmp.eq.s32.totalorder %s19, 1
      %p48 = por %p46, %p47
      %p49 = scmp.ne.s32.totalorder %s41, %s44
      %p50 = scmp.eq.s32.totalorder %s19, 0
      %p51 = por %p49, %p50
      %p52 = scmp.ne.s32.totalorder %s41, %s44
      %p53 = scmp.eq.s32.totalorder %s24, 1
      %p54 = por %p52, %p53
      %p55 = scmp.ne.s32.totalorder %s44, %s45
      %p56 = scmp.eq.s32.totalorder %s24, 0
      %p57 = por %p55, %p56
      %p58 = scmp.ne.s32.totalorder %s44, %s45
      %p59 = scmp.eq.s32.totalorder %s25, 1
      %p60 = por %p58, %p59
      %p62 = scmp.ne.s32.totalorder %s45, %s61
      %p63 = scmp.eq.s32.totalorder %s25, 0
      %p64 = por %p62, %p63
      %s65 = ssub.s32 %s27, %s34
      %p66 = scmp.eq.s32.totalorder %s65, 0
      %s68 = sadd.s32 %s67, 1
      %s69 = scalar_select %p66, %s67, %s68
      %p72 = pneg %p66
      %p73 = scmp.eq.s32.totalorder %s19, 1
      %p74 = por %p72, %p73
      %p75 = scmp.ne.s32.totalorder %s67, %s70
      %p76 = scmp.eq.s32.totalorder %s19, 0
      %p77 = por %p75, %p76
      %p78 = scmp.ne.s32.totalorder %s67, %s70
      %p79 = scmp.eq.s32.totalorder %s24, 1
      %p80 = por %p78, %p79
      %p81 = scmp.ne.s32.totalorder %s70, %s71
      %p82 = scmp.eq.s32.totalorder %s24, 0
      %p83 = por %p81, %p82
      %p84 = scmp.ne.s32.totalorder %s70, %s71
      %p85 = scmp.eq.s32.totalorder %s25, 1
      %p86 = por %p84, %p85
      %p88 = scmp.ne.s32.totalorder %s71, %s87
      %p89 = scmp.eq.s32.totalorder %s25, 0
      %p90 = por %p88, %p89
      %s91 = ssub.s32 %s27, %s34
      %p92 = scmp.eq.s32.totalorder %s91, 0
      %s94 = sadd.s32 %s93, 1
      %s95 = scalar_select %p92, %s93, %s94
      %p98 = pneg %p92
      %p99 = scmp.eq.s32.totalorder %s19, 1
      %p100 = por %p98, %p99
      %p101 = scmp.ne.s32.totalorder %s93, %s96
      %p102 = scmp.eq.s32.totalorder %s19, 0
      %p103 = por %p101, %p102
      %p104 = scmp.ne.s32.totalorder %s93, %s96
      %p105 = scmp.eq.s32.totalorder %s24, 1
      %p106 = por %p104, %p105
      %p107 = scmp.ne.s32.totalorder %s96, %s97
      %p108 = scmp.eq.s32.totalorder %s24, 0
      %p109 = por %p107, %p108
      %p110 = scmp.ne.s32.totalorder %s96, %s97
      %p111 = scmp.eq.s32.totalorder %s25, 1
      %p112 = por %p110, %p111
      %p114 = scmp.ne.s32.totalorder %s97, %s113
      %p115 = scmp.eq.s32.totalorder %s25, 0
      %p116 = por %p114, %p115
      %s117 = ssub.s32 %s27, %s34
      %p118 = scmp.eq.s32.totalorder %s117, 0
      %s120 = sadd.s32 %s119, 1
      %s121 = scalar_select %p118, %s119, %s120
      %p124 = pneg %p118
      %p125 = scmp.eq.s32.totalorder %s19, 1
      %p126 = por %p124, %p125
      %p127 = scmp.ne.s32.totalorder %s119, %s122
      %p128 = scmp.eq.s32.totalorder %s19, 0
      %p129 = por %p127, %p128
      %p130 = scmp.ne.s32.totalorder %s119, %s122
      %p131 = scmp.eq.s32.totalorder %s24, 1
      %p132 = por %p130, %p131
      %p133 = scmp.ne.s32.totalorder %s122, %s123
      %p134 = scmp.eq.s32.totalorder %s24, 0
      %p135 = por %p133, %p134
      %p136 = scmp.ne.s32.totalorder %s122, %s123
      %p137 = scmp.eq.s32.totalorder %s25, 1
      %p138 = por %p136, %p137
      %p140 = scmp.ne.s32.totalorder %s123, %s139
      %p141 = scmp.eq.s32.totalorder %s25, 0
      %p142 = por %p140, %p141
      %s144 = sadd.s32 %s143, 1
      %p147 = scmp.eq.s32.totalorder %s19, 1
      %p148 = scmp.ne.s32.totalorder %s143, %s145
      %p149 = scmp.eq.s32.totalorder %s19, 0
      %p150 = por %p148, %p149
      %p151 = scmp.ne.s32.totalorder %s143, %s145
      %p152 = scmp.eq.s32.totalorder %s24, 1
      %p153 = por %p151, %p152
      %p154 = scmp.ne.s32.totalorder %s145, %s146
      %p155 = scmp.eq.s32.totalorder %s24, 0
      %p156 = por %p154, %p155
      %p157 = scmp.ne.s32.totalorder %s145, %s146
      %p158 = scmp.eq.s32.totalorder %s25, 1
      %p159 = por %p157, %p158
      %p161 = scmp.ne.s32.totalorder %s146, %s160
      %p162 = scmp.eq.s32.totalorder %s25, 0
      %p163 = por %p161, %p162
      %s164 = ssub.s32 %s26, %s38
      %p165 = scmp.eq.s32.totalorder %s164, 0
      %s167 = sadd.s32 %s166, 1
      %s168 = scalar_select %p165, %s166, %s167
      %p171 = pneg %p165
      %p172 = scmp.eq.s32.totalorder %s19, 1
      %p173 = por %p171, %p172
      %p174 = scmp.ne.s32.totalorder %s166, %s169
      %p175 = scmp.eq.s32.totalorder %s19, 0
      %p176 = por %p174, %p175
      %p177 = scmp.ne.s32.totalorder %s166, %s169
      %p178 = scmp.eq.s32.totalorder %s24, 1
      %p179 = por %p177, %p178
      %p180 = scmp.ne.s32.totalorder %s169, %s170
      %p181 = scmp.eq.s32.totalorder %s24, 0
      %p182 = por %p180, %p181
      %p183 = scmp.ne.s32.totalorder %s169, %s170
      %p184 = scmp.eq.s32.totalorder %s25, 1
      %p185 = por %p183, %p184
      %p187 = scmp.ne.s32.totalorder %s170, %s186
      %p188 = scmp.eq.s32.totalorder %s25, 0
      %p189 = por %p187, %p188
      %p190 = scmp.le.s32.totalorder 1, %s19
      %p191 = scmp.lt.s32.totalorder %s19, 3
      %p192 = pnand %p190, %p191
      %p193 = pneg %p192
      // Predicated region
      $region9: #{tpu_custom_call.1} parent=5 // pred_check
        _
      $region10: #{tpu_custom_call.1} parent=5 // pred_check_branch
        %195 = sbr.rel (%p192) target = $region12
      $region11: #{tpu_custom_call.1} parent=5 // pred_region
        %s196 = ssub.s32 %s19, 1
        // Predicated region
        $region13: #{tpu_custom_call.1} parent=11 // pred_check
          %p197 = pneg %p57
        $region14: #{tpu_custom_call.1} parent=11 // pred_check_branch
          %199 = sbr.rel (%p197) target = $region16
        $region15: #{tpu_custom_call.1} parent=11 // pred_region
          %s200 = smul.u32 2, %s28
          %s202 = ssub.s32 256, 256
          %203 = vsyncadd [#allocation4], %s202
          %s204 = smul.addr %s200, 2
          %s205 = smul.addr %s204, 64
          %s206 = scalar_lea.hbm %s0, %s205
          %s207 = sshll.u32 [#allocation3], 4
          %s208 = int_to_ptr.vmem [resolvable:$true] %s207
          %213 = dma.hbm_to_vmem [thread:$0]  %s206, 256, %s208, [#allocation4], 128, 128, 8
        $region16: #{tpu_custom_call.1} parent=11 // pred_fallthru
          _
        // Predicated region
        $region17: #{tpu_custom_call.1} parent=11 // pred_check
          %p214 = pneg %p156
        $region18: #{tpu_custom_call.1} parent=11 // pred_check_branch
          %216 = sbr.rel (%p214) target = $region20
        $region19: #{tpu_custom_call.1} parent=11 // pred_region
          _
        $region20: #{tpu_custom_call.1} parent=11 // pred_fallthru
          _
      $region12: #{tpu_custom_call.1} parent=5 // pred_fallthru
        _
      %p217 = scmp.lt.s32.totalorder %s19, 2
      // Predicated region
      $region21: #{tpu_custom_call.1} parent=5 // pred_check
        %p218 = pneg %p217
      $region22: #{tpu_custom_call.1} parent=5 // pred_check_branch
        %220 = sbr.rel (%p218) target = $region24
      $region23: #{tpu_custom_call.1} parent=5 // pred_region
        // Predicated region
        $region25: #{tpu_custom_call.1} parent=23 // pred_check
          %p221 = pneg %p77
        $region26: #{tpu_custom_call.1} parent=23 // pred_check_branch
          %223 = sbr.rel (%p221) target = $region28
        $region27: #{tpu_custom_call.1} parent=23 // pred_region
          %s224 = sand.u32 %s19, 1
          %s225 = scalar_lea.sflag [#allocation7], %s224
          %s226 = sand.u32 %s67, 1
          %s227 = smul.addr %s226, 512
          %s228 = scalar_lea.vmem [#allocation6], %s227
          %s229 = smul.u32 4, %s27
          %s231 = ssub.s32 8192, 8192
          %232 = vsyncadd %s225, %s231
          %s233 = smul.addr %s229, 64
          %s234 = scalar_lea.hbm %s1, %s233
          %s235 = sshll.u32 %s228, 4
          %s236 = int_to_ptr.vmem [resolvable:$true] %s235
          %241 = dma.hbm_to_vmem [thread:$0]  %s234, 8192, %s236, %s225, 512, 256, 16
        $region28: #{tpu_custom_call.1} parent=23 // pred_fallthru
          _
        // Predicated region
        $region29: #{tpu_custom_call.1} parent=23 // pred_check
          %p242 = pneg %p103
        $region30: #{tpu_custom_call.1} parent=23 // pred_check_branch
          %244 = sbr.rel (%p242) target = $region32
        $region31: #{tpu_custom_call.1} parent=23 // pred_region
          %s245 = sand.u32 %s19, 1
          %s246 = scalar_lea.sflag [#allocation7], %s245
          %s247 = sand.u32 %s93, 1
          %s248 = smul.addr %s247, 4
          %s249 = scalar_lea.vmem [#allocation8], %s248
          %s250 = smul.u32 4, %s27
          %s252 = ssub.s32 64, 64
          %253 = vsyncadd %s246, %s252
          %s254 = smul.addr %s250, 16
          %s255 = scalar_lea.hbm %s2, %s254
          %s257 = sshll.u32 %s249, 4
          %s258 = int_to_ptr.vmem [resolvable:$true] %s257
          %260 = dma.hbm_to_vmem [thread:$0]  %s255, 64, %s258, %s246
        $region32: #{tpu_custom_call.1} parent=23 // pred_fallthru
          _
        // Predicated region
        $region33: #{tpu_custom_call.1} parent=23 // pred_check
          %p261 = pneg %p129
        $region34: #{tpu_custom_call.1} parent=23 // pred_check_branch
          %263 = sbr.rel (%p261) target = $region36
        $region35: #{tpu_custom_call.1} parent=23 // pred_region
          %s264 = sand.u32 %s119, 1
          %s265 = scalar_lea.sflag [#allocation10], %s264
          %s266 = sand.u32 %s119, 1
          %s267 = smul.addr %s266, 512
          %s268 = scalar_lea.vmem [#allocation9], %s267
          %s269 = smul.u32 64, %s27
          %s271 = ssub.s32 8192, 8192
          %272 = vsyncadd %s265, %s271
          %s273 = smul.addr %s269, 2
          %s274 = smul.addr %s273, 64
          %s275 = scalar_lea.hbm %s3, %s274
          %s276 = sshll.u32 %s268, 4
          %s277 = int_to_ptr.vmem [resolvable:$true] %s276
          %282 = dma.hbm_to_vmem [thread:$0]  %s275, 8192, %s277, %s265, 128, 128, 8
        $region36: #{tpu_custom_call.1} parent=23 // pred_fallthru
          _
      $region24: #{tpu_custom_call.1} parent=5 // pred_fallthru
        _
      %p283 = scmp.le.s32.totalorder 1, %s19
      %p284 = scmp.lt.s32.totalorder %s19, 3
      %p285 = pnand %p283, %p284
      %p286 = pneg %p285
      // Predicated region
      $region37: #{tpu_custom_call.1} parent=5 // pred_check
        _
      $region38: #{tpu_custom_call.1} parent=5 // pred_check_branch
        %288 = sbr.rel (%p285) target = $region40
      $region39: #{tpu_custom_call.1} parent=5 // pred_region
        %s289 = ssub.s32 %s19, 1
        // Predicated region
        $region41: #{tpu_custom_call.1} parent=39 // pred_check
          %p290 = pneg %p57
        $region42: #{tpu_custom_call.1} parent=39 // pred_check_branch
          %292 = sbr.rel (%p290) target = $region44
        $region43: #{tpu_custom_call.1} parent=39 // pred_region
          %293 = dma.done [#allocation4], 256
        $region44: #{tpu_custom_call.1} parent=39 // pred_fallthru
          _
        %s294 = sand.u32 %s24, 1
        %s295 = scalar_lea.sflag [#allocation7], %s294
        %s296 = sand.u32 %s70, 1
        %s297 = smul.addr %s296, 512
        %s298 = scalar_lea.vmem [#allocation6], %s297
        // Predicated region
        $region45: #{tpu_custom_call.1} parent=39 // pred_check
          %p299 = pneg %p83
        $region46: #{tpu_custom_call.1} parent=39 // pred_check_branch
          %301 = sbr.rel (%p299) target = $region48
        $region47: #{tpu_custom_call.1} parent=39 // pred_region
          %302 = dma.done %s295, 8192
        $region48: #{tpu_custom_call.1} parent=39 // pred_fallthru
          _
        %s303 = sand.u32 %s24, 1
        %s304 = scalar_lea.sflag [#allocation7], %s303
        %s305 = sand.u32 %s96, 1
        %s306 = smul.addr %s305, 4
        %s307 = scalar_lea.vmem [#allocation8], %s306
        // Predicated region
        $region49: #{tpu_custom_call.1} parent=39 // pred_check
          %p308 = pneg %p109
        $region50: #{tpu_custom_call.1} parent=39 // pred_check_branch
          %310 = sbr.rel (%p308) target = $region52
        $region51: #{tpu_custom_call.1} parent=39 // pred_region
          %311 = dma.done %s304, 64
        $region52: #{tpu_custom_call.1} parent=39 // pred_fallthru
          _
        %s312 = sand.u32 %s122, 1
        %s313 = scalar_lea.sflag [#allocation10], %s312
        %s314 = sand.u32 %s122, 1
        %s315 = smul.addr %s314, 512
        %s316 = scalar_lea.vmem [#allocation9], %s315
        // Predicated region
        $region53: #{tpu_custom_call.1} parent=39 // pred_check
          %p317 = pneg %p135
        $region54: #{tpu_custom_call.1} parent=39 // pred_check_branch
          %319 = sbr.rel (%p317) target = $region56
        $region55: #{tpu_custom_call.1} parent=39 // pred_region
          %320 = dma.done %s313, 8192
        $region56: #{tpu_custom_call.1} parent=39 // pred_fallthru
          _
        %p321 = pneg %p57
        %p322 = pneg %p54
        %s323 = sand.u32 %s24, 1
        %s324 = scalar_lea.sflag [#allocation7], %s323
        %s325 = sand.u32 %s70, 1
        %s326 = smul.addr %s325, 512
        %s327 = scalar_lea.vmem [#allocation6], %s326
        %p328 = pneg %p83
        %p329 = pneg %p80
        %s330 = sand.u32 %s24, 1
        %s331 = scalar_lea.sflag [#allocation7], %s330
        %s332 = sand.u32 %s96, 1
        %s333 = smul.addr %s332, 4
        %s334 = scalar_lea.vmem [#allocation8], %s333
        %p335 = pneg %p109
        %p336 = pneg %p106
        %s337 = sand.u32 %s122, 1
        %s338 = scalar_lea.sflag [#allocation10], %s337
        %s339 = sand.u32 %s122, 1
        %s340 = smul.addr %s339, 512
        %s341 = scalar_lea.vmem [#allocation9], %s340
        %p342 = pneg %p135
        %p343 = pneg %p132
        %p344 = pneg %p156
        %p345 = pneg %p153
        %p346 = pneg %p182
        %p347 = pneg %p179
        %s348 = smul.u32 2, %s28
        %s349 = smul.u32 4, %s29
        %s350 = smul.u32 4, %s29
        %s351 = smul.u32 64, %s29
        %s352 = smul.u32 2, %s28
        %p353 = scmp.eq.s32.totalorder %s29, 0
        // Predicated region
        $region57: #{tpu_custom_call.1} parent=39 // pred_check
          %p354 = pneg %p353
        $region58: #{tpu_custom_call.1} parent=39 // pred_check_branch
          %356 = sbr.rel (%p354) target = $region60
        $region59: #{tpu_custom_call.1} parent=39 // pred_region
          %357 = vst [vmem:[#allocation2] sm:$0xff] 0.0
          %358 = vst [vmem:[#allocation2 + $0x8] sm:$0xff] 0.0
          %359 = vst [vmem:[#allocation2 + $0x10] sm:$0xff] 0.0
          %360 = vst [vmem:[#allocation2 + $0x18] sm:$0xff] 0.0
        $region60: #{tpu_custom_call.1} parent=39 // pred_fallthru
          _
        %v361 = vld [vmem:[#allocation3] sm:$0xff]
        %v362 = vld [vmem:[#allocation3 + $0x8] sm:$0xff]
        %v363 = vld [vmem:[%s298] sm:$0xff]
        %v364 = vld [vmem:[%s298 + $0x8] sm:$0xff]
        %v365 = vld [vmem:[%s298 + $0x10] sm:$0xff]
        %v366 = vld [vmem:[%s298 + $0x18] sm:$0xff]
        %v367 = vld [vmem:[%s298 + $0x20] sm:$0xff]
        %v368 = vld [vmem:[%s298 + $0x28] sm:$0xff]
        %v369 = vld [vmem:[%s298 + $0x30] sm:$0xff]
        %v370 = vld [vmem:[%s298 + $0x38] sm:$0xff]
        %v371 = vld [vmem:[%s298 + $0x40] sm:$0xff]
        %v372 = vld [vmem:[%s298 + $0x48] sm:$0xff]
        %v373 = vld [vmem:[%s298 + $0x50] sm:$0xff]
        %v374 = vld [vmem:[%s298 + $0x58] sm:$0xff]
        %v375 = vld [vmem:[%s298 + $0x60] sm:$0xff]
        %v376 = vld [vmem:[%s298 + $0x68] sm:$0xff]
        %v377 = vld [vmem:[%s298 + $0x70] sm:$0xff]
        %v378 = vld [vmem:[%s298 + $0x78] sm:$0xff]
        %v379 = vld [vmem:[%s298 + $0x80] sm:$0xff]
        %v380 = vld [vmem:[%s298 + $0x88] sm:$0xff]
        %v381 = vld [vmem:[%s298 + $0x90] sm:$0xff]
        %v382 = vld [vmem:[%s298 + $0x98] sm:$0xff]
        %v383 = vld [vmem:[%s298 + $0xa0] sm:$0xff]
        %v384 = vld [vmem:[%s298 + $0xa8] sm:$0xff]
        %v385 = vld [vmem:[%s298 + $0xb0] sm:$0xff]
        %v386 = vld [vmem:[%s298 + $0xb8] sm:$0xff]
        %v387 = vld [vmem:[%s298 + $0xc0] sm:$0xff]
        %v388 = vld [vmem:[%s298 + $0xc8] sm:$0xff]
        %v389 = vld [vmem:[%s298 + $0xd0] sm:$0xff]
        %v390 = vld [vmem:[%s298 + $0xd8] sm:$0xff]
        %v391 = vld [vmem:[%s298 + $0xe0] sm:$0xff]
        %v392 = vld [vmem:[%s298 + $0xe8] sm:$0xff]
        %v393 = vld [vmem:[%s298 + $0xf0] sm:$0xff]
        %v394 = vld [vmem:[%s298 + $0xf8] sm:$0xff]
        %v395 = vld [vmem:[%s298 + $0x100] sm:$0xff]
        %v396 = vld [vmem:[%s298 + $0x108] sm:$0xff]
        %v397 = vld [vmem:[%s298 + $0x110] sm:$0xff]
        %v398 = vld [vmem:[%s298 + $0x118] sm:$0xff]
        %v399 = vld [vmem:[%s298 + $0x120] sm:$0xff]
        %v400 = vld [vmem:[%s298 + $0x128] sm:$0xff]
        %v401 = vld [vmem:[%s298 + $0x130] sm:$0xff]
        %v402 = vld [vmem:[%s298 + $0x138] sm:$0xff]
        %v403 = vld [vmem:[%s298 + $0x140] sm:$0xff]
        %v404 = vld [vmem:[%s298 + $0x148] sm:$0xff]
        %v405 = vld [vmem:[%s298 + $0x150] sm:$0xff]
        %v406 = vld [vmem:[%s298 + $0x158] sm:$0xff]
        %v407 = vld [vmem:[%s298 + $0x160] sm:$0xff]
        %v408 = vld [vmem:[%s298 + $0x168] sm:$0xff]
        %v409 = vld [vmem:[%s298 + $0x170] sm:$0xff]
        %v410 = vld [vmem:[%s298 + $0x178] sm:$0xff]
        %v411 = vld [vmem:[%s298 + $0x180] sm:$0xff]
        %v412 = vld [vmem:[%s298 + $0x188] sm:$0xff]
        %v413 = vld [vmem:[%s298 + $0x190] sm:$0xff]
        %v414 = vld [vmem:[%s298 + $0x198] sm:$0xff]
        %v415 = vld [vmem:[%s298 + $0x1a0] sm:$0xff]
        %v416 = vld [vmem:[%s298 + $0x1a8] sm:$0xff]
        %v417 = vld [vmem:[%s298 + $0x1b0] sm:$0xff]
        %v418 = vld [vmem:[%s298 + $0x1b8] sm:$0xff]
        %v419 = vld [vmem:[%s298 + $0x1c0] sm:$0xff]
        %v420 = vld [vmem:[%s298 + $0x1c8] sm:$0xff]
        %v421 = vld [vmem:[%s298 + $0x1d0] sm:$0xff]
        %v422 = vld [vmem:[%s298 + $0x1d8] sm:$0xff]
        %v423 = vld [vmem:[%s298 + $0x1e0] sm:$0xff]
        %v424 = vld [vmem:[%s298 + $0x1e8] sm:$0xff]
        %v425 = vld [vmem:[%s298 + $0x1f0] sm:$0xff]
        %v426 = vld [vmem:[%s298 + $0x1f8] sm:$0xff]
        %v427 = vld [vmem:[%s307] sm:$0xf]
        %v429 = vlaneseq
        %v430 = vshrl.u32 %v429, 7
        %v431 = vsub.s32 0, %v430
        %v432 = vrot.slane %v427, %v431
        %v433 = vlaneseq
        %v434 = vshrl.u32 %v433, 7
        %v435 = vsub.s32 1, %v434
        %v436 = vrot.slane %v427, %v435
        %v437 = vlaneseq
        %v438 = vshrl.u32 %v437, 7
        %v439 = vsub.s32 2, %v438
        %v440 = vrot.slane %v427, %v439
        %v441 = vlaneseq
        %v442 = vshrl.u32 %v441, 7
        %v443 = vsub.s32 3, %v442
        %v444 = vrot.slane %v427, %v443
        %v451 = vunpack.c.l.b16 %v361
        %v452 = vunpack.c.h.b16 %v361
        %v453 = vunpack.c.l.b16 %v362
        %v454 = vunpack.c.h.b16 %v362
        %v455 = vpack.c.b16 %v453, %v451
        %v456 = vpack.c.b16 %v454, %v452
        %v523 = vunpack.c.l.b16 %v363
        %v524 = vunpack.c.h.b16 %v363
        %v525 = vunpack.c.l.b16 %v364
        %v526 = vunpack.c.h.b16 %v364
        %v527 = vunpack.c.l.b16 %v365
        %v528 = vunpack.c.h.b16 %v365
        %v529 = vunpack.c.l.b16 %v366
        %v530 = vunpack.c.h.b16 %v366
        %v531 = vunpack.c.l.b16 %v367
        %v532 = vunpack.c.h.b16 %v367
        %v533 = vunpack.c.l.b16 %v368
        %v534 = vunpack.c.h.b16 %v368
        %v535 = vunpack.c.l.b16 %v369
        %v536 = vunpack.c.h.b16 %v369
        %v537 = vunpack.c.l.b16 %v370
        %v538 = vunpack.c.h.b16 %v370
        %v539 = vunpack.c.l.b16 %v371
        %v540 = vunpack.c.h.b16 %v371
        %v541 = vunpack.c.l.b16 %v372
        %v542 = vunpack.c.h.b16 %v372
        %v543 = vunpack.c.l.b16 %v373
        %v544 = vunpack.c.h.b16 %v373
        %v545 = vunpack.c.l.b16 %v374
        %v546 = vunpack.c.h.b16 %v374
        %v547 = vunpack.c.l.b16 %v375
        %v548 = vunpack.c.h.b16 %v375
        %v549 = vunpack.c.l.b16 %v376
        %v550 = vunpack.c.h.b16 %v376
        %v551 = vunpack.c.l.b16 %v377
        %v552 = vunpack.c.h.b16 %v377
        %v553 = vunpack.c.l.b16 %v378
        %v554 = vunpack.c.h.b16 %v378
        %v555 = vunpack.c.l.b16 %v379
        %v556 = vunpack.c.h.b16 %v379
        %v557 = vunpack.c.l.b16 %v380
        %v558 = vunpack.c.h.b16 %v380
        %v559 = vunpack.c.l.b16 %v381
        %v560 = vunpack.c.h.b16 %v381
        %v561 = vunpack.c.l.b16 %v382
        %v562 = vunpack.c.h.b16 %v382
        %v563 = vunpack.c.l.b16 %v383
        %v564 = vunpack.c.h.b16 %v383
        %v565 = vunpack.c.l.b16 %v384
        %v566 = vunpack.c.h.b16 %v384
        %v567 = vunpack.c.l.b16 %v385
        %v568 = vunpack.c.h.b16 %v385
        %v569 = vunpack.c.l.b16 %v386
        %v570 = vunpack.c.h.b16 %v386
        %v571 = vunpack.c.l.b16 %v387
        %v572 = vunpack.c.h.b16 %v387
        %v573 = vunpack.c.l.b16 %v388
        %v574 = vunpack.c.h.b16 %v388
        %v575 = vunpack.c.l.b16 %v389
        %v576 = vunpack.c.h.b16 %v389
        %v577 = vunpack.c.l.b16 %v390
        %v578 = vunpack.c.h.b16 %v390
        %v579 = vunpack.c.l.b16 %v391
        %v580 = vunpack.c.h.b16 %v391
        %v581 = vunpack.c.l.b16 %v392
        %v582 = vunpack.c.h.b16 %v392
        %v583 = vunpack.c.l.b16 %v393
        %v584 = vunpack.c.h.b16 %v393
        %v585 = vunpack.c.l.b16 %v394
        %v586 = vunpack.c.h.b16 %v394
        %v587 = vunpack.c.l.b16 %v395
        %v588 = vunpack.c.h.b16 %v395
        %v589 = vunpack.c.l.b16 %v396
        %v590 = vunpack.c.h.b16 %v396
        %v591 = vunpack.c.l.b16 %v397
        %v592 = vunpack.c.h.b16 %v397
        %v593 = vunpack.c.l.b16 %v398
        %v594 = vunpack.c.h.b16 %v398
        %v595 = vunpack.c.l.b16 %v399
        %v596 = vunpack.c.h.b16 %v399
        %v597 = vunpack.c.l.b16 %v400
        %v598 = vunpack.c.h.b16 %v400
        %v599 = vunpack.c.l.b16 %v401
        %v600 = vunpack.c.h.b16 %v401
        %v601 = vunpack.c.l.b16 %v402
        %v602 = vunpack.c.h.b16 %v402
        %v603 = vunpack.c.l.b16 %v403
        %v604 = vunpack.c.h.b16 %v403
        %v605 = vunpack.c.l.b16 %v404
        %v606 = vunpack.c.h.b16 %v404
        %v607 = vunpack.c.l.b16 %v405
        %v608 = vunpack.c.h.b16 %v405
        %v609 = vunpack.c.l.b16 %v406
        %v610 = vunpack.c.h.b16 %v406
        %v611 = vunpack.c.l.b16 %v407
        %v612 = vunpack.c.h.b16 %v407
        %v613 = vunpack.c.l.b16 %v408
        %v614 = vunpack.c.h.b16 %v408
        %v615 = vunpack.c.l.b16 %v409
        %v616 = vunpack.c.h.b16 %v409
        %v617 = vunpack.c.l.b16 %v410
        %v618 = vunpack.c.h.b16 %v410
        %v619 = vunpack.c.l.b16 %v411
        %v620 = vunpack.c.h.b16 %v411
        %v621 = vunpack.c.l.b16 %v412
        %v622 = vunpack.c.h.b16 %v412
        %v623 = vunpack.c.l.b16 %v413
        %v624 = vunpack.c.h.b16 %v413
        %v625 = vunpack.c.l.b16 %v414
        %v626 = vunpack.c.h.b16 %v414
        %v627 = vunpack.c.l.b16 %v415
        %v628 = vunpack.c.h.b16 %v415
        %v629 = vunpack.c.l.b16 %v416
        %v630 = vunpack.c.h.b16 %v416
        %v631 = vunpack.c.l.b16 %v417
        %v632 = vunpack.c.h.b16 %v417
        %v633 = vunpack.c.l.b16 %v418
        %v634 = vunpack.c.h.b16 %v418
        %v635 = vunpack.c.l.b16 %v419
        %v636 = vunpack.c.h.b16 %v419
        %v637 = vunpack.c.l.b16 %v420
        %v638 = vunpack.c.h.b16 %v420
        %v639 = vunpack.c.l.b16 %v421
        %v640 = vunpack.c.h.b16 %v421
        %v641 = vunpack.c.l.b16 %v422
        %v642 = vunpack.c.h.b16 %v422
        %v643 = vunpack.c.l.b16 %v423
        %v644 = vunpack.c.h.b16 %v423
        %v645 = vunpack.c.l.b16 %v424
        %v646 = vunpack.c.h.b16 %v424
        %v647 = vunpack.c.l.b16 %v425
        %v648 = vunpack.c.h.b16 %v425
        %v649 = vunpack.c.l.b16 %v426
        %v650 = vunpack.c.h.b16 %v426
        %v651 = vpack.c.b16 %v527, %v523
        %v652 = vpack.c.b16 %v528, %v524
        %v653 = vpack.c.b16 %v529, %v525
        %v654 = vpack.c.b16 %v530, %v526
        %v655 = vpack.c.b16 %v535, %v531
        %v656 = vpack.c.b16 %v536, %v532
        %v657 = vpack.c.b16 %v537, %v533
        %v658 = vpack.c.b16 %v538, %v534
        %v659 = vpack.c.b16 %v543, %v539
        %v660 = vpack.c.b16 %v544, %v540
        %v661 = vpack.c.b16 %v545, %v541
        %v662 = vpack.c.b16 %v546, %v542
        %v663 = vpack.c.b16 %v551, %v547
        %v664 = vpack.c.b16 %v552, %v548
        %v665 = vpack.c.b16 %v553, %v549
        %v666 = vpack.c.b16 %v554, %v550
        %v667 = vpack.c.b16 %v559, %v555
        %v668 = vpack.c.b16 %v560, %v556
        %v669 = vpack.c.b16 %v561, %v557
        %v670 = vpack.c.b16 %v562, %v558
        %v671 = vpack.c.b16 %v567, %v563
        %v672 = vpack.c.b16 %v568, %v564
        %v673 = vpack.c.b16 %v569, %v565
        %v674 = vpack.c.b16 %v570, %v566
        %v675 = vpack.c.b16 %v575, %v571
        %v676 = vpack.c.b16 %v576, %v572
        %v677 = vpack.c.b16 %v577, %v573
        %v678 = vpack.c.b16 %v578, %v574
        %v679 = vpack.c.b16 %v583, %v579
        %v680 = vpack.c.b16 %v584, %v580
        %v681 = vpack.c.b16 %v585, %v581
        %v682 = vpack.c.b16 %v586, %v582
        %v683 = vpack.c.b16 %v591, %v587
        %v684 = vpack.c.b16 %v592, %v588
        %v685 = vpack.c.b16 %v593, %v589
        %v686 = vpack.c.b16 %v594, %v590
        %v687 = vpack.c.b16 %v599, %v595
        %v688 = vpack.c.b16 %v600, %v596
        %v689 = vpack.c.b16 %v601, %v597
        %v690 = vpack.c.b16 %v602, %v598
        %v691 = vpack.c.b16 %v607, %v603
        %v692 = vpack.c.b16 %v608, %v604
        %v693 = vpack.c.b16 %v609, %v605
        %v694 = vpack.c.b16 %v610, %v606
        %v695 = vpack.c.b16 %v615, %v611
        %v696 = vpack.c.b16 %v616, %v612
        %v697 = vpack.c.b16 %v617, %v613
        %v698 = vpack.c.b16 %v618, %v614
        %v699 = vpack.c.b16 %v623, %v619
        %v700 = vpack.c.b16 %v624, %v620
        %v701 = vpack.c.b16 %v625, %v621
        %v702 = vpack.c.b16 %v626, %v622
        %v703 = vpack.c.b16 %v631, %v627
        %v704 = vpack.c.b16 %v632, %v628
        %v705 = vpack.c.b16 %v633, %v629
        %v706 = vpack.c.b16 %v634, %v630
        %v707 = vpack.c.b16 %v639, %v635
        %v708 = vpack.c.b16 %v640, %v636
        %v709 = vpack.c.b16 %v641, %v637
        %v710 = vpack.c.b16 %v642, %v638
        %v711 = vpack.c.b16 %v647, %v643
        %v712 = vpack.c.b16 %v648, %v644
        %v713 = vpack.c.b16 %v649, %v645
        %v714 = vpack.c.b16 %v650, %v646
        %779 = vmatprep.subr.bf16.mxu0 %v652
        %780 = vmatpush1.bf16.msra.mxu0 %v651
        %781 = vmatprep.subr.bf16.mxu0 %v656
        %782 = vmatpush1.bf16.msra.mxu0 %v655
        %783 = vmatprep.subr.bf16.mxu0 %v660
        %784 = vmatpush1.bf16.msra.mxu0 %v659
        %785 = vmatprep.subr.bf16.mxu0 %v664
        %786 = vmatpush1.bf16.msra.mxu0 %v663
        %787 = vmatprep.subr.bf16.mxu0 %v668
        %788 = vmatpush1.bf16.msra.mxu0 %v667
        %789 = vmatprep.subr.bf16.mxu0 %v672
        %790 = vmatpush1.bf16.msra.mxu0 %v671
        %791 = vmatprep.subr.bf16.mxu0 %v676
        %792 = vmatpush1.bf16.msra.mxu0 %v675
        %793 = vmatprep.subr.bf16.mxu0 %v680
        %794 = vmatpush1.bf16.msra.mxu0 %v679
        %795 = vmatprep.subr.bf16.mxu0 %v684
        %796 = vmatpush1.bf16.msra.mxu0 %v683
        %797 = vmatprep.subr.bf16.mxu0 %v688
        %798 = vmatpush1.bf16.msra.mxu0 %v687
        %799 = vmatprep.subr.bf16.mxu0 %v692
        %800 = vmatpush1.bf16.msra.mxu0 %v691
        %801 = vmatprep.subr.bf16.mxu0 %v696
        %802 = vmatpush1.bf16.msra.mxu0 %v695
        %803 = vmatprep.subr.bf16.mxu0 %v700
        %804 = vmatpush1.bf16.msra.mxu0 %v699
        %805 = vmatprep.subr.bf16.mxu0 %v704
        %806 = vmatpush1.bf16.msra.mxu0 %v703
        %807 = vmatprep.subr.bf16.mxu0 %v708
        %808 = vmatpush1.bf16.msra.mxu0 %v707
        %809 = vmatprep.subr.bf16.mxu0 %v712
        %810 = vmatpush1.bf16.msra.mxu0 %v711
        %811 = vmatprep.mubr.bf16.mxu0 %v456
        %812 = vmatmul.mubr.bf16.gmra.mrb[0].mxu0 %v455
        %v813 = vpop.f32.mrb[0].mxu0
        %v814 = vadd.f32 %v432, %v813
        %v815 = vpop.f32.mrb[0].mxu0
        %v816 = vadd.f32 %v436, %v815
        %v817 = vpop.f32.mrb[0].mxu0
        %v818 = vadd.f32 %v432, %v817
        %v819 = vpop.f32.mrb[0].mxu0
        %v820 = vadd.f32 %v436, %v819
        %821 = vdwg.mxu0
        %822 = vmatprep.subr.bf16.mxu0 %v654
        %823 = vmatpush1.bf16.msra.mxu0 %v653
        %824 = vmatprep.subr.bf16.mxu0 %v658
        %825 = vmatpush1.bf16.msra.mxu0 %v657
        %826 = vmatprep.subr.bf16.mxu0 %v662
        %827 = vmatpush1.bf16.msra.mxu0 %v661
        %828 = vmatprep.subr.bf16.mxu0 %v666
        %829 = vmatpush1.bf16.msra.mxu0 %v665
        %830 = vmatprep.subr.bf16.mxu0 %v670
        %831 = vmatpush1.bf16.msra.mxu0 %v669
        %832 = vmatprep.subr.bf16.mxu0 %v674
        %833 = vmatpush1.bf16.msra.mxu0 %v673
        %834 = vmatprep.subr.bf16.mxu0 %v678
        %835 = vmatpush1.bf16.msra.mxu0 %v677
        %836 = vmatprep.subr.bf16.mxu0 %v682
        %837 = vmatpush1.bf16.msra.mxu0 %v681
        %838 = vmatprep.subr.bf16.mxu0 %v686
        %839 = vmatpush1.bf16.msra.mxu0 %v685
        %840 = vmatprep.subr.bf16.mxu0 %v690
        %841 = vmatpush1.bf16.msra.mxu0 %v689
        %842 = vmatprep.subr.bf16.mxu0 %v694
        %843 = vmatpush1.bf16.msra.mxu0 %v693
        %844 = vmatprep.subr.bf16.mxu0 %v698
        %845 = vmatpush1.bf16.msra.mxu0 %v697
        %846 = vmatprep.subr.bf16.mxu0 %v702
        %847 = vmatpush1.bf16.msra.mxu0 %v701
        %848 = vmatprep.subr.bf16.mxu0 %v706
        %849 = vmatpush1.bf16.msra.mxu0 %v705
        %850 = vmatprep.subr.bf16.mxu0 %v710
        %851 = vmatpush1.bf16.msra.mxu0 %v709
        %852 = vmatprep.subr.bf16.mxu0 %v714
        %853 = vmatpush1.bf16.msra.mxu0 %v713
        %854 = vmatprep.mubr.bf16.mxu0 %v456
        %855 = vmatmul.mubr.bf16.gmra.mrb[0].mxu0 %v455
        %v856 = vpop.f32.mrb[0].mxu0
        %v857 = vadd.f32 %v440, %v856
        %v858 = vpop.f32.mrb[0].mxu0
        %v859 = vadd.f32 %v444, %v858
        %v860 = vpop.f32.mrb[0].mxu0
        %v861 = vadd.f32 %v440, %v860
        %v862 = vpop.f32.mrb[0].mxu0
        %v863 = vadd.f32 %v444, %v862
        %864 = vdwg.mxu0
        %v865 = vmax.f32 %v814, 0.0
        %v866 = vmax.f32 %v816, 0.0
        %v867 = vmax.f32 %v857, 0.0
        %v868 = vmax.f32 %v859, 0.0
        %v869 = vmax.f32 %v818, 0.0
        %v870 = vmax.f32 %v820, 0.0
        %v871 = vmax.f32 %v861, 0.0
        %v872 = vmax.f32 %v863, 0.0
        %v873 = vld [vmem:[#allocation2] sm:$0xff]
        %v874 = vld [vmem:[#allocation2 + $0x8] sm:$0xff]
        %v875 = vld [vmem:[#allocation2 + $0x10] sm:$0xff]
        %v876 = vld [vmem:[#allocation2 + $0x18] sm:$0xff]
        %v877 = vpack.c.bf16 %v869, %v865
        %v878 = vpack.c.bf16 %v870, %v866
        %v879 = vpack.c.bf16 %v871, %v867
        %v880 = vpack.c.bf16 %v872, %v868
        %v881 = vld [vmem:[%s316] sm:$0xff]
        %v882 = vld [vmem:[%s316 + $0x8] sm:$0xff]
        %v883 = vld [vmem:[%s316 + $0x10] sm:$0xff]
        %v884 = vld [vmem:[%s316 + $0x18] sm:$0xff]
        %v885 = vld [vmem:[%s316 + $0x20] sm:$0xff]
        %v886 = vld [vmem:[%s316 + $0x28] sm:$0xff]
        %v887 = vld [vmem:[%s316 + $0x30] sm:$0xff]
        %v888 = vld [vmem:[%s316 + $0x38] sm:$0xff]
        %v889 = vld [vmem:[%s316 + $0x40] sm:$0xff]
        %v890 = vld [vmem:[%s316 + $0x48] sm:$0xff]
        %v891 = vld [vmem:[%s316 + $0x50] sm:$0xff]
        %v892 = vld [vmem:[%s316 + $0x58] sm:$0xff]
        %v893 = vld [vmem:[%s316 + $0x60] sm:$0xff]
        %v894 = vld [vmem:[%s316 + $0x68] sm:$0xff]
        %v895 = vld [vmem:[%s316 + $0x70] sm:$0xff]
        %v896 = vld [vmem:[%s316 + $0x78] sm:$0xff]
        %v897 = vld [vmem:[%s316 + $0x80] sm:$0xff]
        %v898 = vld [vmem:[%s316 + $0x88] sm:$0xff]
        %v899 = vld [vmem:[%s316 + $0x90] sm:$0xff]
        %v900 = vld [vmem:[%s316 + $0x98] sm:$0xff]
        %v901 = vld [vmem:[%s316 + $0xa0] sm:$0xff]
        %v902 = vld [vmem:[%s316 + $0xa8] sm:$0xff]
        %v903 = vld [vmem:[%s316 + $0xb0] sm:$0xff]
        %v904 = vld [vmem:[%s316 + $0xb8] sm:$0xff]
        %v905 = vld [vmem:[%s316 + $0xc0] sm:$0xff]
        %v906 = vld [vmem:[%s316 + $0xc8] sm:$0xff]
        %v907 = vld [vmem:[%s316 + $0xd0] sm:$0xff]
        %v908 = vld [vmem:[%s316 + $0xd8] sm:$0xff]
        %v909 = vld [vmem:[%s316 + $0xe0] sm:$0xff]
        %v910 = vld [vmem:[%s316 + $0xe8] sm:$0xff]
        %v911 = vld [vmem:[%s316 + $0xf0] sm:$0xff]
        %v912 = vld [vmem:[%s316 + $0xf8] sm:$0xff]
        %v913 = vld [vmem:[%s316 + $0x100] sm:$0xff]
        %v914 = vld [vmem:[%s316 + $0x108] sm:$0xff]
        %v915 = vld [vmem:[%s316 + $0x110] sm:$0xff]
        %v916 = vld [vmem:[%s316 + $0x118] sm:$0xff]
        %v917 = vld [vmem:[%s316 + $0x120] sm:$0xff]
        %v918 = vld [vmem:[%s316 + $0x128] sm:$0xff]
        %v919 = vld [vmem:[%s316 + $0x130] sm:$0xff]
        %v920 = vld [vmem:[%s316 + $0x138] sm:$0xff]
        %v921 = vld [vmem:[%s316 + $0x140] sm:$0xff]
        %v922 = vld [vmem:[%s316 + $0x148] sm:$0xff]
        %v923 = vld [vmem:[%s316 + $0x150] sm:$0xff]
        %v924 = vld [vmem:[%s316 + $0x158] sm:$0xff]
        %v925 = vld [vmem:[%s316 + $0x160] sm:$0xff]
        %v926 = vld [vmem:[%s316 + $0x168] sm:$0xff]
        %v927 = vld [vmem:[%s316 + $0x170] sm:$0xff]
        %v928 = vld [vmem:[%s316 + $0x178] sm:$0xff]
        %v929 = vld [vmem:[%s316 + $0x180] sm:$0xff]
        %v930 = vld [vmem:[%s316 + $0x188] sm:$0xff]
        %v931 = vld [vmem:[%s316 + $0x190] sm:$0xff]
        %v932 = vld [vmem:[%s316 + $0x198] sm:$0xff]
        %v933 = vld [vmem:[%s316 + $0x1a0] sm:$0xff]
        %v934 = vld [vmem:[%s316 + $0x1a8] sm:$0xff]
        %v935 = vld [vmem:[%s316 + $0x1b0] sm:$0xff]
        %v936 = vld [vmem:[%s316 + $0x1b8] sm:$0xff]
        %v937 = vld [vmem:[%s316 + $0x1c0] sm:$0xff]
        %v938 = vld [vmem:[%s316 + $0x1c8] sm:$0xff]
        %v939 = vld [vmem:[%s316 + $0x1d0] sm:$0xff]
        %v940 = vld [vmem:[%s316 + $0x1d8] sm:$0xff]
        %v941 = vld [vmem:[%s316 + $0x1e0] sm:$0xff]
        %v942 = vld [vmem:[%s316 + $0x1e8] sm:$0xff]
        %v943 = vld [vmem:[%s316 + $0x1f0] sm:$0xff]
        %v944 = vld [vmem:[%s316 + $0x1f8] sm:$0xff]
        %v1009 = vunpack.c.l.b16 %v881
        %v1010 = vunpack.c.h.b16 %v881
        %v1011 = vunpack.c.l.b16 %v882
        %v1012 = vunpack.c.h.b16 %v882
        %v1013 = vunpack.c.l.b16 %v883
        %v1014 = vunpack.c.h.b16 %v883
        %v1015 = vunpack.c.l.b16 %v884
        %v1016 = vunpack.c.h.b16 %v884
        %v1017 = vunpack.c.l.b16 %v885
        %v1018 = vunpack.c.h.b16 %v885
        %v1019 = vunpack.c.l.b16 %v886
        %v1020 = vunpack.c.h.b16 %v886
        %v1021 = vunpack.c.l.b16 %v887
        %v1022 = vunpack.c.h.b16 %v887
        %v1023 = vunpack.c.l.b16 %v888
        %v1024 = vunpack.c.h.b16 %v888
        %v1025 = vunpack.c.l.b16 %v889
        %v1026 = vunpack.c.h.b16 %v889
        %v1027 = vunpack.c.l.b16 %v890
        %v1028 = vunpack.c.h.b16 %v890
        %v1029 = vunpack.c.l.b16 %v891
        %v1030 = vunpack.c.h.b16 %v891
        %v1031 = vunpack.c.l.b16 %v892
        %v1032 = vunpack.c.h.b16 %v892
        %v1033 = vunpack.c.l.b16 %v893
        %v1034 = vunpack.c.h.b16 %v893
        %v1035 = vunpack.c.l.b16 %v894
        %v1036 = vunpack.c.h.b16 %v894
        %v1037 = vunpack.c.l.b16 %v895
        %v1038 = vunpack.c.h.b16 %v895
        %v1039 = vunpack.c.l.b16 %v896
        %v1040 = vunpack.c.h.b16 %v896
        %v1041 = vunpack.c.l.b16 %v897
        %v1042 = vunpack.c.h.b16 %v897
        %v1043 = vunpack.c.l.b16 %v898
        %v1044 = vunpack.c.h.b16 %v898
        %v1045 = vunpack.c.l.b16 %v899
        %v1046 = vunpack.c.h.b16 %v899
        %v1047 = vunpack.c.l.b16 %v900
        %v1048 = vunpack.c.h.b16 %v900
        %v1049 = vunpack.c.l.b16 %v901
        %v1050 = vunpack.c.h.b16 %v901
        %v1051 = vunpack.c.l.b16 %v902
        %v1052 = vunpack.c.h.b16 %v902
        %v1053 = vunpack.c.l.b16 %v903
        %v1054 = vunpack.c.h.b16 %v903
        %v1055 = vunpack.c.l.b16 %v904
        %v1056 = vunpack.c.h.b16 %v904
        %v1057 = vunpack.c.l.b16 %v905
        %v1058 = vunpack.c.h.b16 %v905
        %v1059 = vunpack.c.l.b16 %v906
        %v1060 = vunpack.c.h.b16 %v906
        %v1061 = vunpack.c.l.b16 %v907
        %v1062 = vunpack.c.h.b16 %v907
        %v1063 = vunpack.c.l.b16 %v908
        %v1064 = vunpack.c.h.b16 %v908
        %v1065 = vunpack.c.l.b16 %v909
        %v1066 = vunpack.c.h.b16 %v909
        %v1067 = vunpack.c.l.b16 %v910
        %v1068 = vunpack.c.h.b16 %v910
        %v1069 = vunpack.c.l.b16 %v911
        %v1070 = vunpack.c.h.b16 %v911
        %v1071 = vunpack.c.l.b16 %v912
        %v1072 = vunpack.c.h.b16 %v912
        %v1073 = vunpack.c.l.b16 %v913
        %v1074 = vunpack.c.h.b16 %v913
        %v1075 = vunpack.c.l.b16 %v914
        %v1076 = vunpack.c.h.b16 %v914
        %v1077 = vunpack.c.l.b16 %v915
        %v1078 = vunpack.c.h.b16 %v915
        %v1079 = vunpack.c.l.b16 %v916
        %v1080 = vunpack.c.h.b16 %v916
        %v1081 = vunpack.c.l.b16 %v917
        %v1082 = vunpack.c.h.b16 %v917
        %v1083 = vunpack.c.l.b16 %v918
        %v1084 = vunpack.c.h.b16 %v918
        %v1085 = vunpack.c.l.b16 %v919
        %v1086 = vunpack.c.h.b16 %v919
        %v1087 = vunpack.c.l.b16 %v920
        %v1088 = vunpack.c.h.b16 %v920
        %v1089 = vunpack.c.l.b16 %v921
        %v1090 = vunpack.c.h.b16 %v921
        %v1091 = vunpack.c.l.b16 %v922
        %v1092 = vunpack.c.h.b16 %v922
        %v1093 = vunpack.c.l.b16 %v923
        %v1094 = vunpack.c.h.b16 %v923
        %v1095 = vunpack.c.l.b16 %v924
        %v1096 = vunpack.c.h.b16 %v924
        %v1097 = vunpack.c.l.b16 %v925
        %v1098 = vunpack.c.h.b16 %v925
        %v1099 = vunpack.c.l.b16 %v926
        %v1100 = vunpack.c.h.b16 %v926
        %v1101 = vunpack.c.l.b16 %v927
        %v1102 = vunpack.c.h.b16 %v927
        %v1103 = vunpack.c.l.b16 %v928
        %v1104 = vunpack.c.h.b16 %v928
        %v1105 = vunpack.c.l.b16 %v929
        %v1106 = vunpack.c.h.b16 %v929
        %v1107 = vunpack.c.l.b16 %v930
        %v1108 = vunpack.c.h.b16 %v930
        %v1109 = vunpack.c.l.b16 %v931
        %v1110 = vunpack.c.h.b16 %v931
        %v1111 = vunpack.c.l.b16 %v932
        %v1112 = vunpack.c.h.b16 %v932
        %v1113 = vunpack.c.l.b16 %v933
        %v1114 = vunpack.c.h.b16 %v933
        %v1115 = vunpack.c.l.b16 %v934
        %v1116 = vunpack.c.h.b16 %v934
        %v1117 = vunpack.c.l.b16 %v935
        %v1118 = vunpack.c.h.b16 %v935
        %v1119 = vunpack.c.l.b16 %v936
        %v1120 = vunpack.c.h.b16 %v936
        %v1121 = vunpack.c.l.b16 %v937
        %v1122 = vunpack.c.h.b16 %v937
        %v1123 = vunpack.c.l.b16 %v938
        %v1124 = vunpack.c.h.b16 %v938
        %v1125 = vunpack.c.l.b16 %v939
        %v1126 = vunpack.c.h.b16 %v939
        %v1127 = vunpack.c.l.b16 %v940
        %v1128 = vunpack.c.h.b16 %v940
        %v1129 = vunpack.c.l.b16 %v941
        %v1130 = vunpack.c.h.b16 %v941
        %v1131 = vunpack.c.l.b16 %v942
        %v1132 = vunpack.c.h.b16 %v942
        %v1133 = vunpack.c.l.b16 %v943
        %v1134 = vunpack.c.h.b16 %v943
        %v1135 = vunpack.c.l.b16 %v944
        %v1136 = vunpack.c.h.b16 %v944
        %v1137 = vpack.c.b16 %v1011, %v1009
        %v1138 = vpack.c.b16 %v1012, %v1010
        %v1139 = vpack.c.b16 %v1015, %v1013
        %v1140 = vpack.c.b16 %v1016, %v1014
        %v1141 = vpack.c.b16 %v1019, %v1017
        %v1142 = vpack.c.b16 %v1020, %v1018
        %v1143 = vpack.c.b16 %v1023, %v1021
        %v1144 = vpack.c.b16 %v1024, %v1022
        %v1145 = vpack.c.b16 %v1027, %v1025
        %v1146 = vpack.c.b16 %v1028, %v1026
        %v1147 = vpack.c.b16 %v1031, %v1029
        %v1148 = vpack.c.b16 %v1032, %v1030
        %v1149 = vpack.c.b16 %v1035, %v1033
        %v1150 = vpack.c.b16 %v1036, %v1034
        %v1151 = vpack.c.b16 %v1039, %v1037
        %v1152 = vpack.c.b16 %v1040, %v1038
        %v1153 = vpack.c.b16 %v1043, %v1041
        %v1154 = vpack.c.b16 %v1044, %v1042
        %v1155 = vpack.c.b16 %v1047, %v1045
        %v1156 = vpack.c.b16 %v1048, %v1046
        %v1157 = vpack.c.b16 %v1051, %v1049
        %v1158 = vpack.c.b16 %v1052, %v1050
        %v1159 = vpack.c.b16 %v1055, %v1053
        %v1160 = vpack.c.b16 %v1056, %v1054
        %v1161 = vpack.c.b16 %v1059, %v1057
        %v1162 = vpack.c.b16 %v1060, %v1058
        %v1163 = vpack.c.b16 %v1063, %v1061
        %v1164 = vpack.c.b16 %v1064, %v1062
        %v1165 = vpack.c.b16 %v1067, %v1065
        %v1166 = vpack.c.b16 %v1068, %v1066
        %v1167 = vpack.c.b16 %v1071, %v1069
        %v1168 = vpack.c.b16 %v1072, %v1070
        %v1169 = vpack.c.b16 %v1075, %v1073
        %v1170 = vpack.c.b16 %v1076, %v1074
        %v1171 = vpack.c.b16 %v1079, %v1077
        %v1172 = vpack.c.b16 %v1080, %v1078
        %v1173 = vpack.c.b16 %v1083, %v1081
        %v1174 = vpack.c.b16 %v1084, %v1082
        %v1175 = vpack.c.b16 %v1087, %v1085
        %v1176 = vpack.c.b16 %v1088, %v1086
        %v1177 = vpack.c.b16 %v1091, %v1089
        %v1178 = vpack.c.b16 %v1092, %v1090
        %v1179 = vpack.c.b16 %v1095, %v1093
        %v1180 = vpack.c.b16 %v1096, %v1094
        %v1181 = vpack.c.b16 %v1099, %v1097
        %v1182 = vpack.c.b16 %v1100, %v1098
        %v1183 = vpack.c.b16 %v1103, %v1101
        %v1184 = vpack.c.b16 %v1104, %v1102
        %v1185 = vpack.c.b16 %v1107, %v1105
        %v1186 = vpack.c.b16 %v1108, %v1106
        %v1187 = vpack.c.b16 %v1111, %v1109
        %v1188 = vpack.c.b16 %v1112, %v1110
        %v1189 = vpack.c.b16 %v1115, %v1113
        %v1190 = vpack.c.b16 %v1116, %v1114
        %v1191 = vpack.c.b16 %v1119, %v1117
        %v1192 = vpack.c.b16 %v1120, %v1118
        %v1193 = vpack.c.b16 %v1123, %v1121
        %v1194 = vpack.c.b16 %v1124, %v1122
        %v1195 = vpack.c.b16 %v1127, %v1125
        %v1196 = vpack.c.b16 %v1128, %v1126
        %v1197 = vpack.c.b16 %v1131, %v1129
        %v1198 = vpack.c.b16 %v1132, %v1130
        %v1199 = vpack.c.b16 %v1135, %v1133
        %v1200 = vpack.c.b16 %v1136, %v1134
        %1265 = vmatprep.subr.bf16.mxu0 %v1138
        %1266 = vmatpush1.bf16.msra.mxu0 %v1137
        %1267 = vmatprep.subr.bf16.mxu0 %v1140
        %1268 = vmatpush1.bf16.msra.mxu0 %v1139
        %1269 = vmatprep.subr.bf16.mxu0 %v1142
        %1270 = vmatpush1.bf16.msra.mxu0 %v1141
        %1271 = vmatprep.subr.bf16.mxu0 %v1144
        %1272 = vmatpush1.bf16.msra.mxu0 %v1143
        %1273 = vmatprep.subr.bf16.mxu0 %v1146
        %1274 = vmatpush1.bf16.msra.mxu0 %v1145
        %1275 = vmatprep.subr.bf16.mxu0 %v1148
        %1276 = vmatpush1.bf16.msra.mxu0 %v1147
        %1277 = vmatprep.subr.bf16.mxu0 %v1150
        %1278 = vmatpush1.bf16.msra.mxu0 %v1149
        %1279 = vmatprep.subr.bf16.mxu0 %v1152
        %1280 = vmatpush1.bf16.msra.mxu0 %v1151
        %1281 = vmatprep.subr.bf16.mxu0 %v1154
        %1282 = vmatpush1.bf16.msra.mxu0 %v1153
        %1283 = vmatprep.subr.bf16.mxu0 %v1156
        %1284 = vmatpush1.bf16.msra.mxu0 %v1155
        %1285 = vmatprep.subr.bf16.mxu0 %v1158
        %1286 = vmatpush1.bf16.msra.mxu0 %v1157
        %1287 = vmatprep.subr.bf16.mxu0 %v1160
        %1288 = vmatpush1.bf16.msra.mxu0 %v1159
        %1289 = vmatprep.subr.bf16.mxu0 %v1162
        %1290 = vmatpush1.bf16.msra.mxu0 %v1161
        %1291 = vmatprep.subr.bf16.mxu0 %v1164
        %1292 = vmatpush1.bf16.msra.mxu0 %v1163
        %1293 = vmatprep.subr.bf16.mxu0 %v1166
        %1294 = vmatpush1.bf16.msra.mxu0 %v1165
        %1295 = vmatprep.subr.bf16.mxu0 %v1168
        %1296 = vmatpush1.bf16.msra.mxu0 %v1167
        %1297 = vmatprep.mubr.bf16.mxu0 %v878
        %1298 = vmatmul.mubr.bf16.gmra.mrb[0].mxu0 %v877
        %v1299 = vpop.f32.mrb[0].mxu0
        %v1300 = vadd.f32 0.0, %v1299
        %v1301 = vpop.f32.mrb[0].mxu0
        %v1302 = vadd.f32 0.0, %v1301
        %v1303 = vpop.f32.mrb[0].mxu0
        %v1304 = vadd.f32 0.0, %v1303
        %v1305 = vpop.f32.mrb[0].mxu0
        %v1306 = vadd.f32 0.0, %v1305
        %1307 = vdwg.mxu0
        %1308 = vmatprep.subr.bf16.mxu0 %v1170
        %1309 = vmatpush1.bf16.msra.mxu0 %v1169
        %1310 = vmatprep.subr.bf16.mxu0 %v1172
        %1311 = vmatpush1.bf16.msra.mxu0 %v1171
        %1312 = vmatprep.subr.bf16.mxu0 %v1174
        %1313 = vmatpush1.bf16.msra.mxu0 %v1173
        %1314 = vmatprep.subr.bf16.mxu0 %v1176
        %1315 = vmatpush1.bf16.msra.mxu0 %v1175
        %1316 = vmatprep.subr.bf16.mxu0 %v1178
        %1317 = vmatpush1.bf16.msra.mxu0 %v1177
        %1318 = vmatprep.subr.bf16.mxu0 %v1180
        %1319 = vmatpush1.bf16.msra.mxu0 %v1179
        %1320 = vmatprep.subr.bf16.mxu0 %v1182
        %1321 = vmatpush1.bf16.msra.mxu0 %v1181
        %1322 = vmatprep.subr.bf16.mxu0 %v1184
        %1323 = vmatpush1.bf16.msra.mxu0 %v1183
        %1324 = vmatprep.subr.bf16.mxu0 %v1186
        %1325 = vmatpush1.bf16.msra.mxu0 %v1185
        %1326 = vmatprep.subr.bf16.mxu0 %v1188
        %1327 = vmatpush1.bf16.msra.mxu0 %v1187
        %1328 = vmatprep.subr.bf16.mxu0 %v1190
        %1329 = vmatpush1.bf16.msra.mxu0 %v1189
        %1330 = vmatprep.subr.bf16.mxu0 %v1192
        %1331 = vmatpush1.bf16.msra.mxu0 %v1191
        %1332 = vmatprep.subr.bf16.mxu0 %v1194
        %1333 = vmatpush1.bf16.msra.mxu0 %v1193
        %1334 = vmatprep.subr.bf16.mxu0 %v1196
        %1335 = vmatpush1.bf16.msra.mxu0 %v1195
        %1336 = vmatprep.subr.bf16.mxu0 %v1198
        %1337 = vmatpush1.bf16.msra.mxu0 %v1197
        %1338 = vmatprep.subr.bf16.mxu0 %v1200
        %1339 = vmatpush1.bf16.msra.mxu0 %v1199
        %1340 = vmatprep.mubr.bf16.mxu0 %v880
        %1341 = vmatmul.mubr.bf16.gmra.mrb[0].mxu0 %v879
        %v1342 = vpop.f32.mrb[0].mxu0
        %v1343 = vadd.f32 %v1300, %v1342
        %v1344 = vpop.f32.mrb[0].mxu0
        %v1345 = vadd.f32 %v1302, %v1344
        %v1346 = vpop.f32.mrb[0].mxu0
        %v1347 = vadd.f32 %v1304, %v1346
        %v1348 = vpop.f32.mrb[0].mxu0
        %v1349 = vadd.f32 %v1306, %v1348
        %1350 = vdwg.mxu0
        %v1351 = vadd.f32 %v873, %v1343
        %v1352 = vadd.f32 %v874, %v1345
        %v1353 = vadd.f32 %v875, %v1347
        %v1354 = vadd.f32 %v876, %v1349
        %1355 = vst [vmem:[#allocation2] sm:$0xff] %v1351
        %1356 = vst [vmem:[#allocation2 + $0x8] sm:$0xff] %v1352
        %1357 = vst [vmem:[#allocation2 + $0x10] sm:$0xff] %v1353
        %1358 = vst [vmem:[#allocation2 + $0x18] sm:$0xff] %v1354
        %p1359 = scmp.eq.s32.totalorder %s29, 1
        // Predicated region
        $region61: #{tpu_custom_call.1} parent=39 // pred_check
          %p1360 = pneg %p1359
        $region62: #{tpu_custom_call.1} parent=39 // pred_check_branch
          %1362 = sbr.rel (%p1360) target = $region64
        $region63: #{tpu_custom_call.1} parent=39 // pred_region
          %v1363 = vld [vmem:[#allocation2] sm:$0xff]
          %v1364 = vld [vmem:[#allocation2 + $0x8] sm:$0xff]
          %v1365 = vld [vmem:[#allocation2 + $0x10] sm:$0xff]
          %v1366 = vld [vmem:[#allocation2 + $0x18] sm:$0xff]
          %v1367 = vld [vmem:[%s4] sm:$0x3]
          %v1369 = vlaneseq
          %v1370 = vshrl.u32 %v1369, 7
          %v1371 = vsub.s32 0, %v1370
          %v1372 = vrot.slane %v1367, %v1371
          %v1373 = vlaneseq
          %v1374 = vshrl.u32 %v1373, 7
          %v1375 = vsub.s32 1, %v1374
          %v1376 = vrot.slane %v1367, %v1375
          %v1379 = vadd.f32 %v1363, %v1372
          %v1380 = vadd.f32 %v1364, %v1376
          %v1381 = vadd.f32 %v1365, %v1372
          %v1382 = vadd.f32 %v1366, %v1376
          %1383 = vst [vmem:[#allocation11] sm:$0xff] %v1379
          %1384 = vst [vmem:[#allocation11 + $0x8] sm:$0xff] %v1380
          %1385 = vst [vmem:[#allocation11 + $0x10] sm:$0xff] %v1381
          %1386 = vst [vmem:[#allocation11 + $0x18] sm:$0xff] %v1382
        $region64: #{tpu_custom_call.1} parent=39 // pred_fallthru
          _
        // Predicated region
        $region65: #{tpu_custom_call.1} parent=39 // pred_check
          %p1387 = pneg %p179
        $region66: #{tpu_custom_call.1} parent=39 // pred_check_branch
          %1389 = sbr.rel (%p1387) target = $region68
        $region67: #{tpu_custom_call.1} parent=39 // pred_region
          %s1390 = smul.u32 2, %s28
          %s1392 = ssub.s32 512, 512
          %1393 = vsyncadd [#allocation5], %s1392
          %s1394 = smul.addr %s1390, 2
          %s1395 = smul.addr %s1394, 128
          %s1396 = scalar_lea.hbm %s5, %s1395
          %s1397 = sshll.u32 [#allocation11], 4
          %s1398 = int_to_ptr.vmem [resolvable:$true] %s1397
          %1403 = dma.vmem_to_hbm [thread:$0]  %s1398, 512, %s1396, [#allocation5], 256, 256, 16
        $region68: #{tpu_custom_call.1} parent=39 // pred_fallthru
          _
        // Predicated region
        $region69: #{tpu_custom_call.1} parent=39 // pred_check
          %p1404 = pneg %p179
        $region70: #{tpu_custom_call.1} parent=39 // pred_check_branch
          %1406 = sbr.rel (%p1404) target = $region72
        $region71: #{tpu_custom_call.1} parent=39 // pred_region
          %1407 = dma.done [#allocation5], 512
        $region72: #{tpu_custom_call.1} parent=39 // pred_fallthru
          _
      $region40: #{tpu_custom_call.1} parent=5 // pred_fallthru
        _
      %p1408 = scmp.le.s32.totalorder 2, %s19
      // Predicated region
      $region73: #{tpu_custom_call.1} parent=5 // pred_check
        %p1409 = pneg %p1408
      $region74: #{tpu_custom_call.1} parent=5 // pred_check_branch
        %1411 = sbr.rel (%p1409) target = $region76
      $region75: #{tpu_custom_call.1} parent=5 // pred_region
        %s1412 = ssub.s32 %s19, 2
      $region76: #{tpu_custom_call.1} parent=5 // pred_fallthru
        _
    $region6: #{tpu_custom_call.1} parent=1 // loop_footer
      %s23 = sadd.s32 1, %s19
    $region7: #{tpu_custom_call.1} parent=1 // loop_footer_branch
      %18 = sbr.rel target = $region3
    $region8: #{tpu_custom_call.1} parent=1 // loop_exit
      _
    %1413 = vsyncpa [#allocation4], 1
    %s1414 = scalar_lea.sflag [#allocation4], 1
    %1415 = vsyncpa %s1414, 1
    %1416 = vsyncpa [#allocation7], 1
    %s1417 = scalar_lea.sflag [#allocation7], 1
    %1418 = vsyncpa %s1417, 1
    %1419 = vsyncpa [#allocation10], 1
    %s1420 = scalar_lea.sflag [#allocation10], 1
    %1421 = vsyncpa %s1420, 1
    %1422 = vsyncpa [#allocation5], 1
    %s1423 = scalar_lea.sflag [#allocation5], 1
    %1424 = vsyncpa %s1423, 1

</llo_original>
